<compile_context>
chip_gen: v5e
topology: v5e:2x2
jax: 0.10.0
libtpu: 0.0.40
codegen_flags: <defaults>
</compile_context>

<pallas_src>
import math

import jax
import jax.numpy as jnp
from jax import lax
from jax.experimental import pallas as pl
from jax.experimental.pallas import tpu as pltpu


def lstm_tagger_kernel(ids_ref, emb_ref, wih_ref, whh_ref, b_ref, wout_ref, bout_ref,
                       out_ref, x_buf, gx_buf, h_buf):
    """Embedding gather + LSTM recurrence + hidden2tag + log_softmax, one block.

    ids_ref  : (seq,)    i32  token ids (SMEM)
    emb_ref  : (V, E)    f32  embedding table (VMEM resident, tiny)
    wih_ref  : (E, 4H)   f32  input->gates weight (transposed, PyTorch gate order i,f,g,o)
    whh_ref  : (H, 4H)   f32  hidden->gates weight (transposed)
    b_ref    : (1, 4H)   f32  b_ih + b_hh (pre-summed)
    wout_ref : (H, T)    f32  hidden2tag weight (transposed)
    bout_ref : (1, T)    f32  hidden2tag bias
    out_ref  : (seq, T)  f32  log-softmax tag scores
    x_buf    : (seq, E)  f32  VMEM scratch: gathered embeddings
    gx_buf   : (seq, 4H) f32  VMEM scratch: hoisted x @ Wih + b
    h_buf    : (seq, H)  f32  VMEM scratch: hidden states
    """
    seq_len = out_ref.shape[0]
    H = whh_ref.shape[0]

    # 1) Embedding gather: ids are SMEM scalars; one dynamic sublane slice of the
    #    VMEM-resident table per row (seq_len small & static -> unrolled, and this
    #    is off the serial-recurrence critical path).
    for t in range(seq_len):
        x_buf[pl.ds(t, 1), :] = emb_ref[pl.ds(ids_ref[t], 1), :]

    # 2) Hoisted input projection: one batched (seq,E)@(E,4H) MXU matmul + fused
    #    bias, done once before the recurrence.
    gx_buf[...] = (
        jnp.dot(x_buf[...], wih_ref[...], preferred_element_type=jnp.float32)
        + b_ref[...]
    )

    whh = whh_ref[...]  # load once; stays in vregs across the unrolled loop

    # 3) Serial recurrence (fully unrolled): only h @ Whh + gate nonlinearities
    #    remain on the per-timestep critical path.
    def step(t, carry):
        h, c = carry                                               # (1, H), (1, H)
        gates = gx_buf[pl.ds(t, 1), :] + jnp.dot(
            h, whh, preferred_element_type=jnp.float32)            # (1, 4H), order i|f|g|o

        # One full-width sigmoid (covers i, f, o; g's lanes are discarded) plus a
        # tanh on the g slice: 2 EUP pushes instead of 4 per step.
        sg = jax.nn.sigmoid(gates)                                 # (1, 4H)
        i_g = sg[:, 0 * H:1 * H]
        f_g = sg[:, 1 * H:2 * H]
        o_g = sg[:, 3 * H:4 * H]
        g_g = jnp.tanh(gates[:, 2 * H:3 * H])

        c_new = f_g * c + i_g * g_g
        h_new = o_g * jnp.tanh(c_new)
        h_buf[pl.ds(t, 1), :] = h_new
        return h_new, c_new

    h0 = jnp.zeros((1, H), jnp.float32)
    c0 = jnp.zeros((1, H), jnp.float32)
    lax.fori_loop(0, seq_len, step, (h0, c0), unroll=True)

    # 4) Batched hidden2tag + log_softmax(dim=1), single (seq, T) store.
    tag = (jnp.dot(h_buf[...], wout_ref[...], preferred_element_type=jnp.float32)
           + bout_ref[...])                                        # (seq, T)
    m = jnp.max(tag, axis=1, keepdims=True)
    lse = m + jnp.log(jnp.sum(jnp.exp(tag - m), axis=1, keepdims=True))
    out_ref[...] = tag - lse


def init_params(key, vocab_size, embedding_dim, hidden_dim, tagset_size):
    """Deterministic parameter init mirroring PyTorch default inits."""
    ks = jax.random.split(key, 7)
    H = hidden_dim
    k_lstm = 1.0 / math.sqrt(H)
    k_lin = 1.0 / math.sqrt(H)
    params = {
        # nn.Embedding: N(0, 1)
        "embedding": jax.random.normal(ks[0], (vocab_size, embedding_dim), jnp.float32),
        # nn.LSTM layer 0: U(-1/sqrt(H), 1/sqrt(H)), gate order i,f,g,o
        "w_ih": jax.random.uniform(ks[1], (4 * H, embedding_dim), jnp.float32, -k_lstm, k_lstm),
        "w_hh": jax.random.uniform(ks[2], (4 * H, H), jnp.float32, -k_lstm, k_lstm),
        "b_ih": jax.random.uniform(ks[3], (4 * H,), jnp.float32, -k_lstm, k_lstm),
        "b_hh": jax.random.uniform(ks[4], (4 * H,), jnp.float32, -k_lstm, k_lstm),
        # nn.Linear(hidden_dim, tagset_size): U(-1/sqrt(in), 1/sqrt(in))
        "w_out": jax.random.uniform(ks[5], (tagset_size, H), jnp.float32, -k_lin, k_lin),
        "b_out": jax.random.uniform(ks[6], (tagset_size,), jnp.float32, -k_lin, k_lin),
    }
    return params


def lstm_tagger_forward(sentence, params):
    """sentence: (seq_len,) int32 token ids -> (seq_len, tagset_size) log-probs."""
    seq_len = sentence.shape[0]
    vocab_size, emb_dim = params["embedding"].shape
    hidden_dim = params["w_hh"].shape[1]
    tagset_size = params["w_out"].shape[0]

    wih_t = jnp.transpose(params["w_ih"])                       # (E, 4H)
    whh_t = jnp.transpose(params["w_hh"])                       # (H, 4H)
    b_sum = (params["b_ih"] + params["b_hh"]).reshape(1, -1)    # (1, 4H)
    wout_t = jnp.transpose(params["w_out"])                     # (H, T)
    bout = params["b_out"].reshape(1, -1)                       # (1, T)

    def full(shape):
        return pl.BlockSpec(shape, lambda: tuple(0 for _ in shape))

    # TODO(synk): for long sequences, add a grid over seq chunks with
    # dimension_semantics=("arbitrary",) and h/c carried in persistent VMEM scratch
    # so embeds-in / tag-scores-out DMAs pipeline against the recurrence; at seq=8
    # everything fits in a single block and pipelining buys nothing.
    out = pl.pallas_call(
        lstm_tagger_kernel,
        out_shape=jax.ShapeDtypeStruct((seq_len, tagset_size), jnp.float32),
        in_specs=[
            pl.BlockSpec(memory_space=pltpu.MemorySpace.SMEM),   # token ids -> SMEM
            full((vocab_size, emb_dim)),
            full(wih_t.shape),
            full(whh_t.shape),
            full(b_sum.shape),
            full(wout_t.shape),
            full(bout.shape),
        ],
        out_specs=full((seq_len, tagset_size)),
        scratch_shapes=[
            pltpu.VMEM((seq_len, emb_dim), jnp.float32),         # gathered embeddings
            pltpu.VMEM((seq_len, 4 * hidden_dim), jnp.float32),  # x @ Wih + b
            pltpu.VMEM((seq_len, hidden_dim), jnp.float32),      # hidden states
        ],
    )(sentence.astype(jnp.int32), params["embedding"], wih_t, whh_t, b_sum, wout_t, bout)
    return out


def reference_forward(sentence, params):
    """Pure-JAX reference of the PyTorch forward (for sanity check)."""
    embeds = params["embedding"][sentence]
    H = params["w_hh"].shape[1]
    wih, whh = params["w_ih"], params["w_hh"]
    b = params["b_ih"] + params["b_hh"]

    def step(carry, x_t):
        h, c = carry
        gates = x_t @ wih.T + h @ whh.T + b
        i = jax.nn.sigmoid(gates[0:H])
        f = jax.nn.sigmoid(gates[H:2 * H])
        g = jnp.tanh(gates[2 * H:3 * H])
        o = jax.nn.sigmoid(gates[3 * H:4 * H])
        c = f * c + i * g
        h = o * jnp.tanh(c)
        return (h, c), h

    (_, _), hs = lax.scan(step, (jnp.zeros(H), jnp.zeros(H)), embeds)
    tag_space = hs @ params["w_out"].T + params["b_out"]
    return jax.nn.log_softmax(tag_space, axis=1)


if __name__ == "__main__":
    EMBEDDING_DIM = 32
    HIDDEN_DIM = 32
    VOCAB_SIZE = 50
    TAGSET_SIZE = 8
    SEQ_LEN = 8

    key = jax.random.PRNGKey(0)
    k_params, k_sent = jax.random.split(key)
    params = init_params(k_params, VOCAB_SIZE, EMBEDDING_DIM, HIDDEN_DIM, TAGSET_SIZE)
    sentence = jax.random.randint(k_sent, (SEQ_LEN,), 0, VOCAB_SIZE, dtype=jnp.int32)

    tag_scores = lstm_tagger_forward(sentence, params)
    jax.block_until_ready(tag_scores)

    ref = reference_forward(sentence, params)
    assert tag_scores.shape == (SEQ_LEN, TAGSET_SIZE)
    assert jnp.allclose(tag_scores, ref, atol=1e-4, rtol=1e-4)

    print("KERNEL_OK")
</pallas_src>

<mosaic_0001>
module attributes {stable_mosaic.version = 11 : i64} {
  func.func @lstm_tagger_kernel(%arg0: memref<8xi32, #tpu.memory_space<smem>>, %arg1: memref<50x32xf32, #tpu.memory_space<vmem>>, %arg2: memref<32x128xf32, #tpu.memory_space<vmem>>, %arg3: memref<32x128xf32, #tpu.memory_space<vmem>>, %arg4: memref<1x128xf32, #tpu.memory_space<vmem>>, %arg5: memref<32x8xf32, #tpu.memory_space<vmem>>, %arg6: memref<1x8xf32, #tpu.memory_space<vmem>>, %arg7: memref<8x8xf32, #tpu.memory_space<vmem>>, %arg8: memref<8x32xf32, #tpu.memory_space<vmem>>, %arg9: memref<8x128xf32, #tpu.memory_space<vmem>>, %arg10: memref<8x32xf32, #tpu.memory_space<vmem>>) attributes {dimension_semantics = [], scalar_prefetch = 0 : i64, scratch_operands = 3 : i64, tpu.core_type = #tpu.core_type<tc>} {
    %c0 = arith.constant 0 : index
    %0 = memref.load %arg0[%c0] : memref<8xi32, #tpu.memory_space<smem>>
    %1 = arith.index_cast %0 : i32 to index
    %c0_0 = arith.constant 0 : index
    %2 = vector.load %arg1[%1, %c0_0] : memref<50x32xf32, #tpu.memory_space<vmem>>, vector<1x32xf32>
    %c0_1 = arith.constant 0 : index
    %c0_2 = arith.constant 0 : index
    %3 = vector.load %arg8[%c0_1, %c0_2] : memref<8x32xf32, #tpu.memory_space<vmem>>, vector<1x32xf32>
    tpu.vector_store %arg8[%c0_1, %c0_2], %2 {strides = array<i32>} : memref<8x32xf32, #tpu.memory_space<vmem>>, vector<1x32xf32>,
    %c1 = arith.constant 1 : index
    %4 = memref.load %arg0[%c1] : memref<8xi32, #tpu.memory_space<smem>>
    %5 = arith.index_cast %4 : i32 to index
    %c0_3 = arith.constant 0 : index
    %6 = vector.load %arg1[%5, %c0_3] : memref<50x32xf32, #tpu.memory_space<vmem>>, vector<1x32xf32>
    %c1_4 = arith.constant 1 : index
    %c0_5 = arith.constant 0 : index
    %7 = vector.load %arg8[%c1_4, %c0_5] : memref<8x32xf32, #tpu.memory_space<vmem>>, vector<1x32xf32>
    tpu.vector_store %arg8[%c1_4, %c0_5], %6 {strides = array<i32>} : memref<8x32xf32, #tpu.memory_space<vmem>>, vector<1x32xf32>,
    %c2 = arith.constant 2 : index
    %8 = memref.load %arg0[%c2] : memref<8xi32, #tpu.memory_space<smem>>
    %9 = arith.index_cast %8 : i32 to index
    %c0_6 = arith.constant 0 : index
    %10 = vector.load %arg1[%9, %c0_6] : memref<50x32xf32, #tpu.memory_space<vmem>>, vector<1x32xf32>
    %c2_7 = arith.constant 2 : index
    %c0_8 = arith.constant 0 : index
    %11 = vector.load %arg8[%c2_7, %c0_8] : memref<8x32xf32, #tpu.memory_space<vmem>>, vector<1x32xf32>
    tpu.vector_store %arg8[%c2_7, %c0_8], %10 {strides = array<i32>} : memref<8x32xf32, #tpu.memory_space<vmem>>, vector<1x32xf32>,
    %c3 = arith.constant 3 : index
    %12 = memref.load %arg0[%c3] : memref<8xi32, #tpu.memory_space<smem>>
    %13 = arith.index_cast %12 : i32 to index
    %c0_9 = arith.constant 0 : index
    %14 = vector.load %arg1[%13, %c0_9] : memref<50x32xf32, #tpu.memory_space<vmem>>, vector<1x32xf32>
    %c3_10 = arith.constant 3 : index
    %c0_11 = arith.constant 0 : index
    %15 = vector.load %arg8[%c3_10, %c0_11] : memref<8x32xf32, #tpu.memory_space<vmem>>, vector<1x32xf32>
    tpu.vector_store %arg8[%c3_10, %c0_11], %14 {strides = array<i32>} : memref<8x32xf32, #tpu.memory_space<vmem>>, vector<1x32xf32>,
    %c4 = arith.constant 4 : index
    %16 = memref.load %arg0[%c4] : memref<8xi32, #tpu.memory_space<smem>>
    %17 = arith.index_cast %16 : i32 to index
    %c0_12 = arith.constant 0 : index
    %18 = vector.load %arg1[%17, %c0_12] : memref<50x32xf32, #tpu.memory_space<vmem>>, vector<1x32xf32>
    %c4_13 = arith.constant 4 : index
    %c0_14 = arith.constant 0 : index
    %19 = vector.load %arg8[%c4_13, %c0_14] : memref<8x32xf32, #tpu.memory_space<vmem>>, vector<1x32xf32>
    tpu.vector_store %arg8[%c4_13, %c0_14], %18 {strides = array<i32>} : memref<8x32xf32, #tpu.memory_space<vmem>>, vector<1x32xf32>,
    %c5 = arith.constant 5 : index
    %20 = memref.load %arg0[%c5] : memref<8xi32, #tpu.memory_space<smem>>
    %21 = arith.index_cast %20 : i32 to index
    %c0_15 = arith.constant 0 : index
    %22 = vector.load %arg1[%21, %c0_15] : memref<50x32xf32, #tpu.memory_space<vmem>>, vector<1x32xf32>
    %c5_16 = arith.constant 5 : index
    %c0_17 = arith.constant 0 : index
    %23 = vector.load %arg8[%c5_16, %c0_17] : memref<8x32xf32, #tpu.memory_space<vmem>>, vector<1x32xf32>
    tpu.vector_store %arg8[%c5_16, %c0_17], %22 {strides = array<i32>} : memref<8x32xf32, #tpu.memory_space<vmem>>, vector<1x32xf32>,
    %c6 = arith.constant 6 : index
    %24 = memref.load %arg0[%c6] : memref<8xi32, #tpu.memory_space<smem>>
    %25 = arith.index_cast %24 : i32 to index
    %c0_18 = arith.constant 0 : index
    %26 = vector.load %arg1[%25, %c0_18] : memref<50x32xf32, #tpu.memory_space<vmem>>, vector<1x32xf32>
    %c6_19 = arith.constant 6 : index
    %c0_20 = arith.constant 0 : index
    %27 = vector.load %arg8[%c6_19, %c0_20] : memref<8x32xf32, #tpu.memory_space<vmem>>, vector<1x32xf32>
    tpu.vector_store %arg8[%c6_19, %c0_20], %26 {strides = array<i32>} : memref<8x32xf32, #tpu.memory_space<vmem>>, vector<1x32xf32>,
    %c7 = arith.constant 7 : index
    %28 = memref.load %arg0[%c7] : memref<8xi32, #tpu.memory_space<smem>>
    %29 = arith.index_cast %28 : i32 to index
    %c0_21 = arith.constant 0 : index
    %30 = vector.load %arg1[%29, %c0_21] : memref<50x32xf32, #tpu.memory_space<vmem>>, vector<1x32xf32>
    %c7_22 = arith.constant 7 : index
    %c0_23 = arith.constant 0 : index
    %31 = vector.load %arg8[%c7_22, %c0_23] : memref<8x32xf32, #tpu.memory_space<vmem>>, vector<1x32xf32>
    tpu.vector_store %arg8[%c7_22, %c0_23], %30 {strides = array<i32>} : memref<8x32xf32, #tpu.memory_space<vmem>>, vector<1x32xf32>,
    %c0_24 = arith.constant 0 : index
    %c0_25 = arith.constant 0 : index
    %32 = vector.load %arg8[%c0_24, %c0_25] : memref<8x32xf32, #tpu.memory_space<vmem>>, vector<8x32xf32>
    %c0_26 = arith.constant 0 : index
    %c0_27 = arith.constant 0 : index
    %33 = vector.load %arg2[%c0_26, %c0_27] : memref<32x128xf32, #tpu.memory_space<vmem>>, vector<32x128xf32>
    %cst = arith.constant dense<0.000000e+00> : vector<8x128xf32>
    %34 = tpu.matmul %32, %33, %cst {dimension_numbers = #tpu.dot_dimension_numbers<[1], [0], [0], [1], [0, 0, 1, 1], [], []>} : vector<8x32xf32>, vector<32x128xf32>, vector<8x128xf32> -> vector<8x128xf32>
    %c0_28 = arith.constant 0 : index
    %c0_29 = arith.constant 0 : index
    %35 = vector.load %arg4[%c0_28, %c0_29] : memref<1x128xf32, #tpu.memory_space<vmem>>, vector<1x128xf32>
    %36 = vector.broadcast %35 : vector<1x128xf32> to vector<8x128xf32>
    %37 = arith.addf %34, %36 : vector<8x128xf32>
    %c0_30 = arith.constant 0 : index
    %c0_31 = arith.constant 0 : index
    %38 = vector.load %arg9[%c0_30, %c0_31] : memref<8x128xf32, #tpu.memory_space<vmem>>, vector<8x128xf32>
    tpu.vector_store %arg9[%c0_30, %c0_31], %37 {strides = array<i32>} : memref<8x128xf32, #tpu.memory_space<vmem>>, vector<8x128xf32>,
    %c0_32 = arith.constant 0 : index
    %c0_33 = arith.constant 0 : index
    %39 = vector.load %arg3[%c0_32, %c0_33] : memref<32x128xf32, #tpu.memory_space<vmem>>, vector<32x128xf32>
    %cst_34 = arith.constant 0.000000e+00 : f32
    %40 = vector.broadcast %cst_34 : f32 to vector<1x32xf32>
    %cst_35 = arith.constant 0.000000e+00 : f32
    %41 = vector.broadcast %cst_35 : f32 to vector<1x32xf32>
    %c0_i32 = arith.constant 0 : i32
    %42 = arith.index_cast %c0_i32 : i32 to index
    %c0_36 = arith.constant 0 : index
    %43 = vector.load %arg9[%42, %c0_36] : memref<8x128xf32, #tpu.memory_space<vmem>>, vector<1x128xf32>
    %cst_37 = arith.constant dense<0.000000e+00> : vector<1x128xf32>
    %44 = tpu.matmul %40, %39, %cst_37 {dimension_numbers = #tpu.dot_dimension_numbers<[1], [0], [0], [1], [0, 0, 1, 1], [], []>} : vector<1x32xf32>, vector<32x128xf32>, vector<1x128xf32> -> vector<1x128xf32>
    %45 = arith.addf %43, %44 : vector<1x128xf32>
    %46 = arith.negf %45 : vector<1x128xf32>
    %47 = math.exp %46 : vector<1x128xf32>
    %cst_38 = arith.constant 1.000000e+00 : f32
    %48 = vector.broadcast %cst_38 : f32 to vector<1x128xf32>
    %49 = arith.addf %48, %47 : vector<1x128xf32>
    %50 = arith.divf %48, %49 : vector<1x128xf32>
    %51 = vector.extract_strided_slice %50 {offsets = [0, 0], sizes = [1, 32], strides = [1, 1]} : vector<1x128xf32> to vector<1x32xf32>
    %52 = vector.extract_strided_slice %50 {offsets = [0, 32], sizes = [1, 32], strides = [1, 1]} : vector<1x128xf32> to vector<1x32xf32>
    %53 = vector.extract_strided_slice %50 {offsets = [0, 96], sizes = [1, 32], strides = [1, 1]} : vector<1x128xf32> to vector<1x32xf32>
    %54 = vector.extract_strided_slice %45 {offsets = [0, 64], sizes = [1, 32], strides = [1, 1]} : vector<1x128xf32> to vector<1x32xf32>
    %55 = math.tanh %54 : vector<1x32xf32>
    %56 = arith.mulf %52, %41 : vector<1x32xf32>
    %57 = arith.mulf %51, %55 : vector<1x32xf32>
    %58 = arith.addf %56, %57 : vector<1x32xf32>
    %59 = math.tanh %58 : vector<1x32xf32>
    %60 = arith.mulf %53, %59 : vector<1x32xf32>
    %61 = arith.index_cast %c0_i32 : i32 to index
    %c0_39 = arith.constant 0 : index
    %62 = vector.load %arg10[%61, %c0_39] : memref<8x32xf32, #tpu.memory_space<vmem>>, vector<1x32xf32>
    tpu.vector_store %arg10[%61, %c0_39], %60 {strides = array<i32>} : memref<8x32xf32, #tpu.memory_space<vmem>>, vector<1x32xf32>,
    %c1_i32 = arith.constant 1 : i32
    %63 = arith.index_cast %c1_i32 : i32 to index
    %c0_40 = arith.constant 0 : index
    %64 = vector.load %arg9[%63, %c0_40] : memref<8x128xf32, #tpu.memory_space<vmem>>, vector<1x128xf32>
    %cst_41 = arith.constant dense<0.000000e+00> : vector<1x128xf32>
    %65 = tpu.matmul %60, %39, %cst_41 {dimension_numbers = #tpu.dot_dimension_numbers<[1], [0], [0], [1], [0, 0, 1, 1], [], []>} : vector<1x32xf32>, vector<32x128xf32>, vector<1x128xf32> -> vector<1x128xf32>
    %66 = arith.addf %64, %65 : vector<1x128xf32>
    %67 = arith.negf %66 : vector<1x128xf32>
    %68 = math.exp %67 : vector<1x128xf32>
    %cst_42 = arith.constant 1.000000e+00 : f32
    %69 = vector.broadcast %cst_42 : f32 to vector<1x128xf32>
    %70 = arith.addf %69, %68 : vector<1x128xf32>
    %71 = arith.divf %69, %70 : vector<1x128xf32>
    %72 = vector.extract_strided_slice %71 {offsets = [0, 0], sizes = [1, 32], strides = [1, 1]} : vector<1x128xf32> to vector<1x32xf32>
    %73 = vector.extract_strided_slice %71 {offsets = [0, 32], sizes = [1, 32], strides = [1, 1]} : vector<1x128xf32> to vector<1x32xf32>
    %74 = vector.extract_strided_slice %71 {offsets = [0, 96], sizes = [1, 32], strides = [1, 1]} : vector<1x128xf32> to vector<1x32xf32>
    %75 = vector.extract_strided_slice %66 {offsets = [0, 64], sizes = [1, 32], strides = [1, 1]} : vector<1x128xf32> to vector<1x32xf32>
    %76 = math.tanh %75 : vector<1x32xf32>
    %77 = arith.mulf %73, %58 : vector<1x32xf32>
    %78 = arith.mulf %72, %76 : vector<1x32xf32>
    %79 = arith.addf %77, %78 : vector<1x32xf32>
    %80 = math.tanh %79 : vector<1x32xf32>
    %81 = arith.mulf %74, %80 : vector<1x32xf32>
    %82 = arith.index_cast %c1_i32 : i32 to index
    %c0_43 = arith.constant 0 : index
    %83 = vector.load %arg10[%82, %c0_43] : memref<8x32xf32, #tpu.memory_space<vmem>>, vector<1x32xf32>
    tpu.vector_store %arg10[%82, %c0_43], %81 {strides = array<i32>} : memref<8x32xf32, #tpu.memory_space<vmem>>, vector<1x32xf32>,
    %c2_i32 = arith.constant 2 : i32
    %84 = arith.index_cast %c2_i32 : i32 to index
    %c0_44 = arith.constant 0 : index
    %85 = vector.load %arg9[%84, %c0_44] : memref<8x128xf32, #tpu.memory_space<vmem>>, vector<1x128xf32>
    %cst_45 = arith.constant dense<0.000000e+00> : vector<1x128xf32>
    %86 = tpu.matmul %81, %39, %cst_45 {dimension_numbers = #tpu.dot_dimension_numbers<[1], [0], [0], [1], [0, 0, 1, 1], [], []>} : vector<1x32xf32>, vector<32x128xf32>, vector<1x128xf32> -> vector<1x128xf32>
    %87 = arith.addf %85, %86 : vector<1x128xf32>
    %88 = arith.negf %87 : vector<1x128xf32>
    %89 = math.exp %88 : vector<1x128xf32>
    %cst_46 = arith.constant 1.000000e+00 : f32
    %90 = vector.broadcast %cst_46 : f32 to vector<1x128xf32>
    %91 = arith.addf %90, %89 : vector<1x128xf32>
    %92 = arith.divf %90, %91 : vector<1x128xf32>
    %93 = vector.extract_strided_slice %92 {offsets = [0, 0], sizes = [1, 32], strides = [1, 1]} : vector<1x128xf32> to vector<1x32xf32>
    %94 = vector.extract_strided_slice %92 {offsets = [0, 32], sizes = [1, 32], strides = [1, 1]} : vector<1x128xf32> to vector<1x32xf32>
    %95 = vector.extract_strided_slice %92 {offsets = [0, 96], sizes = [1, 32], strides = [1, 1]} : vector<1x128xf32> to vector<1x32xf32>
    %96 = vector.extract_strided_slice %87 {offsets = [0, 64], sizes = [1, 32], strides = [1, 1]} : vector<1x128xf32> to vector<1x32xf32>
    %97 = math.tanh %96 : vector<1x32xf32>
    %98 = arith.mulf %94, %79 : vector<1x32xf32>
    %99 = arith.mulf %93, %97 : vector<1x32xf32>
    %100 = arith.addf %98, %99 : vector<1x32xf32>
    %101 = math.tanh %100 : vector<1x32xf32>
    %102 = arith.mulf %95, %101 : vector<1x32xf32>
    %103 = arith.index_cast %c2_i32 : i32 to index
    %c0_47 = arith.constant 0 : index
    %104 = vector.load %arg10[%103, %c0_47] : memref<8x32xf32, #tpu.memory_space<vmem>>, vector<1x32xf32>
    tpu.vector_store %arg10[%103, %c0_47], %102 {strides = array<i32>} : memref<8x32xf32, #tpu.memory_space<vmem>>, vector<1x32xf32>,
    %c3_i32 = arith.constant 3 : i32
    %105 = arith.index_cast %c3_i32 : i32 to index
    %c0_48 = arith.constant 0 : index
    %106 = vector.load %arg9[%105, %c0_48] : memref<8x128xf32, #tpu.memory_space<vmem>>, vector<1x128xf32>
    %cst_49 = arith.constant dense<0.000000e+00> : vector<1x128xf32>
    %107 = tpu.matmul %102, %39, %cst_49 {dimension_numbers = #tpu.dot_dimension_numbers<[1], [0], [0], [1], [0, 0, 1, 1], [], []>} : vector<1x32xf32>, vector<32x128xf32>, vector<1x128xf32> -> vector<1x128xf32>
    %108 = arith.addf %106, %107 : vector<1x128xf32>
    %109 = arith.negf %108 : vector<1x128xf32>
    %110 = math.exp %109 : vector<1x128xf32>
    %cst_50 = arith.constant 1.000000e+00 : f32
    %111 = vector.broadcast %cst_50 : f32 to vector<1x128xf32>
    %112 = arith.addf %111, %110 : vector<1x128xf32>
    %113 = arith.divf %111, %112 : vector<1x128xf32>
    %114 = vector.extract_strided_slice %113 {offsets = [0, 0], sizes = [1, 32], strides = [1, 1]} : vector<1x128xf32> to vector<1x32xf32>
    %115 = vector.extract_strided_slice %113 {offsets = [0, 32], sizes = [1, 32], strides = [1, 1]} : vector<1x128xf32> to vector<1x32xf32>
    %116 = vector.extract_strided_slice %113 {offsets = [0, 96], sizes = [1, 32], strides = [1, 1]} : vector<1x128xf32> to vector<1x32xf32>
    %117 = vector.extract_strided_slice %108 {offsets = [0, 64], sizes = [1, 32], strides = [1, 1]} : vector<1x128xf32> to vector<1x32xf32>
    %118 = math.tanh %117 : vector<1x32xf32>
    %119 = arith.mulf %115, %100 : vector<1x32xf32>
    %120 = arith.mulf %114, %118 : vector<1x32xf32>
    %121 = arith.addf %119, %120 : vector<1x32xf32>
    %122 = math.tanh %121 : vector<1x32xf32>
    %123 = arith.mulf %116, %122 : vector<1x32xf32>
    %124 = arith.index_cast %c3_i32 : i32 to index
    %c0_51 = arith.constant 0 : index
    %125 = vector.load %arg10[%124, %c0_51] : memref<8x32xf32, #tpu.memory_space<vmem>>, vector<1x32xf32>
    tpu.vector_store %arg10[%124, %c0_51], %123 {strides = array<i32>} : memref<8x32xf32, #tpu.memory_space<vmem>>, vector<1x32xf32>,
    %c4_i32 = arith.constant 4 : i32
    %126 = arith.index_cast %c4_i32 : i32 to index
    %c0_52 = arith.constant 0 : index
    %127 = vector.load %arg9[%126, %c0_52] : memref<8x128xf32, #tpu.memory_space<vmem>>, vector<1x128xf32>
    %cst_53 = arith.constant dense<0.000000e+00> : vector<1x128xf32>
    %128 = tpu.matmul %123, %39, %cst_53 {dimension_numbers = #tpu.dot_dimension_numbers<[1], [0], [0], [1], [0, 0, 1, 1], [], []>} : vector<1x32xf32>, vector<32x128xf32>, vector<1x128xf32> -> vector<1x128xf32>
    %129 = arith.addf %127, %128 : vector<1x128xf32>
    %130 = arith.negf %129 : vector<1x128xf32>
    %131 = math.exp %130 : vector<1x128xf32>
    %cst_54 = arith.constant 1.000000e+00 : f32
    %132 = vector.broadcast %cst_54 : f32 to vector<1x128xf32>
    %133 = arith.addf %132, %131 : vector<1x128xf32>
    %134 = arith.divf %132, %133 : vector<1x128xf32>
    %135 = vector.extract_strided_slice %134 {offsets = [0, 0], sizes = [1, 32], strides = [1, 1]} : vector<1x128xf32> to vector<1x32xf32>
    %136 = vector.extract_strided_slice %134 {offsets = [0, 32], sizes = [1, 32], strides = [1, 1]} : vector<1x128xf32> to vector<1x32xf32>
    %137 = vector.extract_strided_slice %134 {offsets = [0, 96], sizes = [1, 32], strides = [1, 1]} : vector<1x128xf32> to vector<1x32xf32>
    %138 = vector.extract_strided_slice %129 {offsets = [0, 64], sizes = [1, 32], strides = [1, 1]} : vector<1x128xf32> to vector<1x32xf32>
    %139 = math.tanh %138 : vector<1x32xf32>
    %140 = arith.mulf %136, %121 : vector<1x32xf32>
    %141 = arith.mulf %135, %139 : vector<1x32xf32>
    %142 = arith.addf %140, %141 : vector<1x32xf32>
    %143 = math.tanh %142 : vector<1x32xf32>
    %144 = arith.mulf %137, %143 : vector<1x32xf32>
    %145 = arith.index_cast %c4_i32 : i32 to index
    %c0_55 = arith.constant 0 : index
    %146 = vector.load %arg10[%145, %c0_55] : memref<8x32xf32, #tpu.memory_space<vmem>>, vector<1x32xf32>
    tpu.vector_store %arg10[%145, %c0_55], %144 {strides = array<i32>} : memref<8x32xf32, #tpu.memory_space<vmem>>, vector<1x32xf32>,
    %c5_i32 = arith.constant 5 : i32
    %147 = arith.index_cast %c5_i32 : i32 to index
    %c0_56 = arith.constant 0 : index
    %148 = vector.load %arg9[%147, %c0_56] : memref<8x128xf32, #tpu.memory_space<vmem>>, vector<1x128xf32>
    %cst_57 = arith.constant dense<0.000000e+00> : vector<1x128xf32>
    %149 = tpu.matmul %144, %39, %cst_57 {dimension_numbers = #tpu.dot_dimension_numbers<[1], [0], [0], [1], [0, 0, 1, 1], [], []>} : vector<1x32xf32>, vector<32x128xf32>, vector<1x128xf32> -> vector<1x128xf32>
    %150 = arith.addf %148, %149 : vector<1x128xf32>
    %151 = arith.negf %150 : vector<1x128xf32>
    %152 = math.exp %151 : vector<1x128xf32>
    %cst_58 = arith.constant 1.000000e+00 : f32
    %153 = vector.broadcast %cst_58 : f32 to vector<1x128xf32>
    %154 = arith.addf %153, %152 : vector<1x128xf32>
    %155 = arith.divf %153, %154 : vector<1x128xf32>
    %156 = vector.extract_strided_slice %155 {offsets = [0, 0], sizes = [1, 32], strides = [1, 1]} : vector<1x128xf32> to vector<1x32xf32>
    %157 = vector.extract_strided_slice %155 {offsets = [0, 32], sizes = [1, 32], strides = [1, 1]} : vector<1x128xf32> to vector<1x32xf32>
    %158 = vector.extract_strided_slice %155 {offsets = [0, 96], sizes = [1, 32], strides = [1, 1]} : vector<1x128xf32> to vector<1x32xf32>
    %159 = vector.extract_strided_slice %150 {offsets = [0, 64], sizes = [1, 32], strides = [1, 1]} : vector<1x128xf32> to vector<1x32xf32>
    %160 = math.tanh %159 : vector<1x32xf32>
    %161 = arith.mulf %157, %142 : vector<1x32xf32>
    %162 = arith.mulf %156, %160 : vector<1x32xf32>
    %163 = arith.addf %161, %162 : vector<1x32xf32>
    %164 = math.tanh %163 : vector<1x32xf32>
    %165 = arith.mulf %158, %164 : vector<1x32xf32>
    %166 = arith.index_cast %c5_i32 : i32 to index
    %c0_59 = arith.constant 0 : index
    %167 = vector.load %arg10[%166, %c0_59] : memref<8x32xf32, #tpu.memory_space<vmem>>, vector<1x32xf32>
    tpu.vector_store %arg10[%166, %c0_59], %165 {strides = array<i32>} : memref<8x32xf32, #tpu.memory_space<vmem>>, vector<1x32xf32>,
    %c6_i32 = arith.constant 6 : i32
    %168 = arith.index_cast %c6_i32 : i32 to index
    %c0_60 = arith.constant 0 : index
    %169 = vector.load %arg9[%168, %c0_60] : memref<8x128xf32, #tpu.memory_space<vmem>>, vector<1x128xf32>
    %cst_61 = arith.constant dense<0.000000e+00> : vector<1x128xf32>
    %170 = tpu.matmul %165, %39, %cst_61 {dimension_numbers = #tpu.dot_dimension_numbers<[1], [0], [0], [1], [0, 0, 1, 1], [], []>} : vector<1x32xf32>, vector<32x128xf32>, vector<1x128xf32> -> vector<1x128xf32>
    %171 = arith.addf %169, %170 : vector<1x128xf32>
    %172 = arith.negf %171 : vector<1x128xf32>
    %173 = math.exp %172 : vector<1x128xf32>
    %cst_62 = arith.constant 1.000000e+00 : f32
    %174 = vector.broadcast %cst_62 : f32 to vector<1x128xf32>
    %175 = arith.addf %174, %173 : vector<1x128xf32>
    %176 = arith.divf %174, %175 : vector<1x128xf32>
    %177 = vector.extract_strided_slice %176 {offsets = [0, 0], sizes = [1, 32], strides = [1, 1]} : vector<1x128xf32> to vector<1x32xf32>
    %178 = vector.extract_strided_slice %176 {offsets = [0, 32], sizes = [1, 32], strides = [1, 1]} : vector<1x128xf32> to vector<1x32xf32>
    %179 = vector.extract_strided_slice %176 {offsets = [0, 96], sizes = [1, 32], strides = [1, 1]} : vector<1x128xf32> to vector<1x32xf32>
    %180 = vector.extract_strided_slice %171 {offsets = [0, 64], sizes = [1, 32], strides = [1, 1]} : vector<1x128xf32> to vector<1x32xf32>
    %181 = math.tanh %180 : vector<1x32xf32>
    %182 = arith.mulf %178, %163 : vector<1x32xf32>
    %183 = arith.mulf %177, %181 : vector<1x32xf32>
    %184 = arith.addf %182, %183 : vector<1x32xf32>
    %185 = math.tanh %184 : vector<1x32xf32>
    %186 = arith.mulf %179, %185 : vector<1x32xf32>
    %187 = arith.index_cast %c6_i32 : i32 to index
    %c0_63 = arith.constant 0 : index
    %188 = vector.load %arg10[%187, %c0_63] : memref<8x32xf32, #tpu.memory_space<vmem>>, vector<1x32xf32>
    tpu.vector_store %arg10[%187, %c0_63], %186 {strides = array<i32>} : memref<8x32xf32, #tpu.memory_space<vmem>>, vector<1x32xf32>,
    %c7_i32 = arith.constant 7 : i32
    %189 = arith.index_cast %c7_i32 : i32 to index
    %c0_64 = arith.constant 0 : index
    %190 = vector.load %arg9[%189, %c0_64] : memref<8x128xf32, #tpu.memory_space<vmem>>, vector<1x128xf32>
    %cst_65 = arith.constant dense<0.000000e+00> : vector<1x128xf32>
    %191 = tpu.matmul %186, %39, %cst_65 {dimension_numbers = #tpu.dot_dimension_numbers<[1], [0], [0], [1], [0, 0, 1, 1], [], []>} : vector<1x32xf32>, vector<32x128xf32>, vector<1x128xf32> -> vector<1x128xf32>
    %192 = arith.addf %190, %191 : vector<1x128xf32>
    %193 = arith.negf %192 : vector<1x128xf32>
    %194 = math.exp %193 : vector<1x128xf32>
    %cst_66 = arith.constant 1.000000e+00 : f32
    %195 = vector.broadcast %cst_66 : f32 to vector<1x128xf32>
    %196 = arith.addf %195, %194 : vector<1x128xf32>
    %197 = arith.divf %195, %196 : vector<1x128xf32>
    %198 = vector.extract_strided_slice %197 {offsets = [0, 0], sizes = [1, 32], strides = [1, 1]} : vector<1x128xf32> to vector<1x32xf32>
    %199 = vector.extract_strided_slice %197 {offsets = [0, 32], sizes = [1, 32], strides = [1, 1]} : vector<1x128xf32> to vector<1x32xf32>
    %200 = vector.extract_strided_slice %197 {offsets = [0, 96], sizes = [1, 32], strides = [1, 1]} : vector<1x128xf32> to vector<1x32xf32>
    %201 = vector.extract_strided_slice %192 {offsets = [0, 64], sizes = [1, 32], strides = [1, 1]} : vector<1x128xf32> to vector<1x32xf32>
    %202 = math.tanh %201 : vector<1x32xf32>
    %203 = arith.mulf %199, %184 : vector<1x32xf32>
    %204 = arith.mulf %198, %202 : vector<1x32xf32>
    %205 = arith.addf %203, %204 : vector<1x32xf32>
    %206 = math.tanh %205 : vector<1x32xf32>
    %207 = arith.mulf %200, %206 : vector<1x32xf32>
    %208 = arith.index_cast %c7_i32 : i32 to index
    %c0_67 = arith.constant 0 : index
    %209 = vector.load %arg10[%208, %c0_67] : memref<8x32xf32, #tpu.memory_space<vmem>>, vector<1x32xf32>
    tpu.vector_store %arg10[%208, %c0_67], %207 {strides = array<i32>} : memref<8x32xf32, #tpu.memory_space<vmem>>, vector<1x32xf32>,
    %c8_i32 = arith.constant 8 : i32
    %c0_68 = arith.constant 0 : index
    %c0_69 = arith.constant 0 : index
    %210 = vector.load %arg10[%c0_68, %c0_69] : memref<8x32xf32, #tpu.memory_space<vmem>>, vector<8x32xf32>
    %c0_70 = arith.constant 0 : index
    %c0_71 = arith.constant 0 : index
    %211 = vector.load %arg5[%c0_70, %c0_71] : memref<32x8xf32, #tpu.memory_space<vmem>>, vector<32x8xf32>
    %cst_72 = arith.constant dense<0.000000e+00> : vector<8x8xf32>
    %212 = tpu.matmul %210, %211, %cst_72 {dimension_numbers = #tpu.dot_dimension_numbers<[1], [0], [0], [1], [0, 0, 1, 1], [], []>} : vector<8x32xf32>, vector<32x8xf32>, vector<8x8xf32> -> vector<8x8xf32>
    %c0_73 = arith.constant 0 : index
    %c0_74 = arith.constant 0 : index
    %213 = vector.load %arg6[%c0_73, %c0_74] : memref<1x8xf32, #tpu.memory_space<vmem>>, vector<1x8xf32>
    %214 = vector.broadcast %213 : vector<1x8xf32> to vector<8x8xf32>
    %215 = arith.addf %212, %214 : vector<8x8xf32>
    %cst_75 = arith.constant dense<0xFF800000> : vector<8xf32>
    %216 = vector.multi_reduction <maximumf>, %215, %cst_75 [1] : vector<8x8xf32> to vector<8xf32>
    %217 = vector.shape_cast %216 : vector<8xf32> to vector<8x1xf32>
    %218 = vector.broadcast %217 : vector<8x1xf32> to vector<8x8xf32>
    %219 = arith.subf %215, %218 : vector<8x8xf32>
    %220 = math.exp %219 : vector<8x8xf32>
    %cst_76 = arith.constant dense<0.000000e+00> : vector<8xf32>
    %221 = vector.multi_reduction <add>, %220, %cst_76 [1] : vector<8x8xf32> to vector<8xf32>
    %222 = vector.shape_cast %221 : vector<8xf32> to vector<8x1xf32>
    %223 = math.log %222 : vector<8x1xf32>
    %224 = arith.addf %217, %223 : vector<8x1xf32>
    %225 = vector.broadcast %224 : vector<8x1xf32> to vector<8x8xf32>
    %226 = arith.subf %215, %225 : vector<8x8xf32>
    %c0_77 = arith.constant 0 : index
    %c0_78 = arith.constant 0 : index
    %227 = vector.load %arg7[%c0_77, %c0_78] : memref<8x8xf32, #tpu.memory_space<vmem>>, vector<8x8xf32>
    tpu.vector_store %arg7[%c0_77, %c0_78], %226 {strides = array<i32>} : memref<8x8xf32, #tpu.memory_space<vmem>>, vector<8x8xf32>,
    return
  }
}

</mosaic_0001>

<llo_original>
// kernel: tpu_custom_call.1
$region0: #{tpu_custom_call.1}
  #allocation0 [shape = 'u32[]', space=smem, size = 0x4, offset = 0x4, fixed_abs, tag = 'smem constant byte address 0x4 - core index']
  #allocation1 [shape = 'u32[72,128]{1,0:T(1,128)}', space=vmem, size = 0x9000, scoped, tag = 'internal scratch']
  #allocation2 [shape = 'f32[8,32]{1,0:T(8,128)}', space=vmem, size = 0x1000, scoped, tag = 'scratch operand']
  #allocation3 [shape = 'f32[8,128]{1,0:T(8,128)}', space=vmem, size = 0x1000, scoped, tag = 'scratch operand']
  #allocation4 [shape = 'f32[8,32]{1,0:T(8,128)}', space=vmem, size = 0x1000, scoped, tag = 'scratch operand']
  %s0 = inlined_call_operand.vmem [shape: s32[8], index: 0, kind: input, shape index: {}]
  %s1 = inlined_call_operand.vmem [shape: f32[50,32], index: 1, kind: input, shape index: {}]
  %s2 = inlined_call_operand.vmem [shape: f32[32,128], index: 2, kind: input, shape index: {}]
  %s3 = inlined_call_operand.vmem [shape: f32[32,128], index: 3, kind: input, shape index: {}]
  %s4 = inlined_call_operand.vmem [shape: f32[1,128], index: 4, kind: input, shape index: {}]
  %s5 = inlined_call_operand.vmem [shape: f32[32,8], index: 5, kind: input, shape index: {}]
  %s6 = inlined_call_operand.vmem [shape: f32[1,8], index: 6, kind: input, shape index: {}]
  %s7 = inlined_call_operand.hbm [shape: f32[8,8], index: 7, kind: output, shape index: {}]
  %s8 = sld [smem:[#allocation0]]
  $region42: #{tpu_custom_call.1} parent=0
    _
  %s10 = ssub.s32 1, %s8
  %s11 = scalar_select 0, %s10, %s8
  $region1: #{tpu_custom_call.1} parent=0
    #allocation5 [shape = 'u8[512]{0}', space=smem, size = 0x200, scoped, tag = 'input window, operand 0, single buffered']
    #allocation6 [shape = 's32[1]{0}', space=sflag, size = 0x4, scoped, tag = 'scoped memory for tpu_custom_call.1']
    #allocation7 [shape = 's32[1]{0}', space=sflag, size = 0x4, scoped, tag = 'scoped memory for tpu_custom_call.1']
    #allocation8 [shape = 'u8[4096]{0}', space=vmem, size = 0x1000, scoped, tag = 'output window, operand 0, single buffered']
    %12 = vsyncpa [#allocation7], 0
    %13 = vsyncpa [#allocation6], 0
    // Predicated region
    $region2: #{tpu_custom_call.1} parent=1 // pred_check
      _
    $region3: #{tpu_custom_call.1} parent=1 // pred_check_branch
      %15 = sbr.rel (0) target = $region5
    $region4: #{tpu_custom_call.1} parent=1 // pred_region
      %17 = vsyncadd [#allocation7], 0
      %s19 = sshll.u32 %s0, 4
      %s20 = int_to_ptr.vmem [resolvable:$true] %s19
      %22 = dma.vmem_to_smem %s20, 16, [#allocation5], [#allocation7]
    $region5: #{tpu_custom_call.1} parent=1 // pred_fallthru
      _
    // Predicated region
    $region6: #{tpu_custom_call.1} parent=1 // pred_check
      _
    $region7: #{tpu_custom_call.1} parent=1 // pred_check_branch
      %24 = sbr.rel (0) target = $region9
    $region8: #{tpu_custom_call.1} parent=1 // pred_region
      _
    $region9: #{tpu_custom_call.1} parent=1 // pred_fallthru
      _
    // Predicated region
    $region10: #{tpu_custom_call.1} parent=1 // pred_check
      _
    $region11: #{tpu_custom_call.1} parent=1 // pred_check_branch
      %26 = sbr.rel (0) target = $region13
    $region12: #{tpu_custom_call.1} parent=1 // pred_region
      _
    $region13: #{tpu_custom_call.1} parent=1 // pred_fallthru
      _
    // Predicated region
    $region14: #{tpu_custom_call.1} parent=1 // pred_check
      _
    $region15: #{tpu_custom_call.1} parent=1 // pred_check_branch
      %28 = sbr.rel (0) target = $region17
    $region16: #{tpu_custom_call.1} parent=1 // pred_region
      _
    $region17: #{tpu_custom_call.1} parent=1 // pred_fallthru
      _
    // Predicated region
    $region18: #{tpu_custom_call.1} parent=1 // pred_check
      _
    $region19: #{tpu_custom_call.1} parent=1 // pred_check_branch
      %30 = sbr.rel (0) target = $region21
    $region20: #{tpu_custom_call.1} parent=1 // pred_region
      _
    $region21: #{tpu_custom_call.1} parent=1 // pred_fallthru
      _
    // Predicated region
    $region22: #{tpu_custom_call.1} parent=1 // pred_check
      _
    $region23: #{tpu_custom_call.1} parent=1 // pred_check_branch
      %32 = sbr.rel (0) target = $region25
    $region24: #{tpu_custom_call.1} parent=1 // pred_region
      _
    $region25: #{tpu_custom_call.1} parent=1 // pred_fallthru
      _
    // Predicated region
    $region26: #{tpu_custom_call.1} parent=1 // pred_check
      _
    $region27: #{tpu_custom_call.1} parent=1 // pred_check_branch
      %34 = sbr.rel (0) target = $region29
    $region28: #{tpu_custom_call.1} parent=1 // pred_region
      _
    $region29: #{tpu_custom_call.1} parent=1 // pred_fallthru
      _
    // Predicated region
    $region30: #{tpu_custom_call.1} parent=1 // pred_check
      _
    $region31: #{tpu_custom_call.1} parent=1 // pred_check_branch
      %36 = sbr.rel (0) target = $region33
    $region32: #{tpu_custom_call.1} parent=1 // pred_region
      %38 = dma.done [#allocation7], 16
    $region33: #{tpu_custom_call.1} parent=1 // pred_fallthru
      _
    %39 = sfence
    %s40 = sld [smem:[#allocation5]]
    %s41 = scalar_lea.vmem %s1, %s40
    %v42 = vld [vmem:[%s41] sm:$0x1]
    %vm43 = vcmask 253952
    %44 = vst.msk [vmem:[#allocation2] sm:$0x1] %vm43, %v42
    %s45 = sld [smem:[#allocation5 + $0x1]]
    %s46 = scalar_lea.vmem %s1, %s45
    %v47 = vld [vmem:[%s46] sm:$0x1]
    %48 = vst.msk [vmem:[#allocation2 + $0x1] sm:$0x1] %vm43, %v47
    %s49 = sld [smem:[#allocation5 + $0x2]]
    %s50 = scalar_lea.vmem %s1, %s49
    %v51 = vld [vmem:[%s50] sm:$0x1]
    %52 = vst.msk [vmem:[#allocation2 + $0x2] sm:$0x1] %vm43, %v51
    %s53 = sld [smem:[#allocation5 + $0x3]]
    %s54 = scalar_lea.vmem %s1, %s53
    %v55 = vld [vmem:[%s54] sm:$0x1]
    %56 = vst.msk [vmem:[#allocation2 + $0x3] sm:$0x1] %vm43, %v55
    %s57 = sld [smem:[#allocation5 + $0x4]]
    %s58 = scalar_lea.vmem %s1, %s57
    %v59 = vld [vmem:[%s58] sm:$0x1]
    %60 = vst.msk [vmem:[#allocation2 + $0x4] sm:$0x1] %vm43, %v59
    %s61 = sld [smem:[#allocation5 + $0x5]]
    %s62 = scalar_lea.vmem %s1, %s61
    %v63 = vld [vmem:[%s62] sm:$0x1]
    %64 = vst.msk [vmem:[#allocation2 + $0x5] sm:$0x1] %vm43, %v63
    %s65 = sld [smem:[#allocation5 + $0x6]]
    %s66 = scalar_lea.vmem %s1, %s65
    %v67 = vld [vmem:[%s66] sm:$0x1]
    %68 = vst.msk [vmem:[#allocation2 + $0x6] sm:$0x1] %vm43, %v67
    %s69 = sld [smem:[#allocation5 + $0x7]]
    %s70 = scalar_lea.vmem %s1, %s69
    %v71 = vld [vmem:[%s70] sm:$0x1]
    %72 = vst.msk [vmem:[#allocation2 + $0x7] sm:$0x1] %vm43, %v71
    %v73 = vld [vmem:[#allocation2] sm:$0xff]
    %v74 = vld [vmem:[%s2] sm:$0xff]
    %v75 = vld [vmem:[%s2 + $0x8] sm:$0xff]
    %v76 = vld [vmem:[%s2 + $0x10] sm:$0xff]
    %v77 = vld [vmem:[%s2 + $0x18] sm:$0xff]
    %v78 = vld [vmem:[%s4] sm:$0x1]
    %v80 = vperm.slane %v78, 0
    %vm82 = vcmask 261120
    %v84 = vsel %vm82, %v73, 0
    %86 = vmatpush.msra.mxu0 0.0
    %87 = vmatpush.msra.mxu0 0.0
    %88 = vmatpush.msra.mxu0 0.0
    %89 = vmatpush.msra.mxu0 0.0
    %90 = vmatpush.msra.mxu0 0.0
    %91 = vmatpush.msra.mxu0 0.0
    %92 = vmatpush.msra.mxu0 0.0
    %93 = vmatpush.msra.mxu0 0.0
    %94 = vmatpush.msra.mxu0 0.0
    %95 = vmatpush.msra.mxu0 0.0
    %96 = vmatpush.msra.mxu0 0.0
    %97 = vmatpush.msra.mxu0 0.0
    %98 = vmatpush.msra.mxu0 %v77
    %99 = vmatpush.msra.mxu0 %v76
    %100 = vmatpush.msra.mxu0 %v75
    %101 = vmatpush.msra.mxu0 %v74
    %102 = vmatmul.f32.gmra.mxu0 %v84
    %v103 = vpop.f32.mrf.mxu0
    %v104 = vadd.f32 %v80, %v103
    %105 = vdwg.mxu0
    %106 = vst [vmem:[#allocation3] sm:$0xff] %v104
    %v107 = vld [vmem:[%s3] sm:$0xff]
    %v108 = vld [vmem:[%s3 + $0x8] sm:$0xff]
    %v109 = vld [vmem:[%s3 + $0x10] sm:$0xff]
    %v110 = vld [vmem:[%s3 + $0x18] sm:$0xff]
    %v111 = vld [vmem:[#allocation3] sm:$0x1]
    %v113 = vsel %vm82, 0.0, 0
    %115 = vmatpush.msra.mxu0 0.0
    %116 = vmatpush.msra.mxu0 0.0
    %117 = vmatpush.msra.mxu0 0.0
    %118 = vmatpush.msra.mxu0 0.0
    %119 = vmatpush.msra.mxu0 0.0
    %120 = vmatpush.msra.mxu0 0.0
    %121 = vmatpush.msra.mxu0 0.0
    %122 = vmatpush.msra.mxu0 0.0
    %123 = vmatpush.msra.mxu0 0.0
    %124 = vmatpush.msra.mxu0 0.0
    %125 = vmatpush.msra.mxu0 0.0
    %126 = vmatpush.msra.mxu0 0.0
    %127 = vmatpush.msra.mxu0 %v110
    %128 = vmatpush.msra.mxu0 %v109
    %129 = vmatpush.msra.mxu0 %v108
    %130 = vmatpush.msra.mxu0 %v107
    %131 = vmatmul.f32.gmra.mxu0 %v113
    %v132 = vpop.f32.mrf.mxu0
    %v133 = vadd.f32 0.0, %v132
    %134 = vdwg.mxu0
    %v135 = vadd.f32 %v111, %v133
    %v136 = vxor.u32 %v135, 2147483648
    %v137 = vmul.f32 %v136, 1.442695
    %v138 = vpow.pop %v137
    %v139 = vadd.f32 %v138, 1.0
    %v140 = vrcp.pop %v139
    %v141 = vmul.f32 %v139, %v140
    %v142 = vsub.f32 1.0, %v141
    %v143 = vmul.f32 %v140, %v142
    %v144 = vadd.f32 %v140, %v143
    %vm145 = vweird.f32 %v139
    %vm146 = vweird.f32 %v140
    %vm147 = vmor %vm145, %vm146
    %v148 = vsel %vm147, %v140, %v144
    %v149 = vand.u32 2147483647, %v139
    %vm150 = vcmp.eq.f32.partialorder %v149, 8.507059e+37
    %v151 = vand.u32 %v139, 2147483648
    %v152 = vor.u32 1.1754944e-38, %v151
    %v153 = vsel %vm150, %v152, %v148
    %v154 = vmul.f32 1.0, %v153
    %v155 = vtanh.pop %v135
    %v156 = vmul.f32 %v154, 0.0
    %158 = vrot.lane.b32.xlu0 %v155, 64
    %v159 = vpop.permute.xlu0 %158
    %v161 = vmul.f32 %v154, %v159
    %163 = vrot.lane.b32.xlu0 %v161, 32
    %v164 = vpop.permute.xlu0 %163
    %v166 = vadd.f32 %v156, %v164
    %v167 = vtanh.pop %v166
    %169 = vrot.lane.b32.xlu0 %v167, 64
    %v170 = vpop.permute.xlu0 %169
    %v172 = vmul.f32 %v154, %v170
    %174 = vrot.lane.b32.xlu0 %v172, 32
    %v175 = vpop.permute.xlu0 %174
    %177 = vst.msk [vmem:[#allocation4] sm:$0x1] %vm43, %v175
    %v178 = vld [vmem:[#allocation3 + $0x1] sm:$0x1]
    %v179 = vsel %vm82, %v175, 0
    %181 = vmatpush.msra.mxu0 0.0
    %182 = vmatpush.msra.mxu0 0.0
    %183 = vmatpush.msra.mxu0 0.0
    %184 = vmatpush.msra.mxu0 0.0
    %185 = vmatpush.msra.mxu0 0.0
    %186 = vmatpush.msra.mxu0 0.0
    %187 = vmatpush.msra.mxu0 0.0
    %188 = vmatpush.msra.mxu0 0.0
    %189 = vmatpush.msra.mxu0 0.0
    %190 = vmatpush.msra.mxu0 0.0
    %191 = vmatpush.msra.mxu0 0.0
    %192 = vmatpush.msra.mxu0 0.0
    %193 = vmatpush.msra.mxu0 %v110
    %194 = vmatpush.msra.mxu0 %v109
    %195 = vmatpush.msra.mxu0 %v108
    %196 = vmatpush.msra.mxu0 %v107
    %197 = vmatmul.f32.gmra.mxu0 %v179
    %v198 = vpop.f32.mrf.mxu0
    %v199 = vadd.f32 0.0, %v198
    %200 = vdwg.mxu0
    %v201 = vadd.f32 %v178, %v199
    %v202 = vxor.u32 %v201, 2147483648
    %v203 = vmul.f32 %v202, 1.442695
    %v204 = vpow.pop %v203
    %v205 = vadd.f32 %v204, 1.0
    %v206 = vrcp.pop %v205
    %v207 = vmul.f32 %v205, %v206
    %v208 = vsub.f32 1.0, %v207
    %v209 = vmul.f32 %v206, %v208
    %v210 = vadd.f32 %v206, %v209
    %vm211 = vweird.f32 %v205
    %vm212 = vweird.f32 %v206
    %vm213 = vmor %vm211, %vm212
    %v214 = vsel %vm213, %v206, %v210
    %v215 = vand.u32 2147483647, %v205
    %vm216 = vcmp.eq.f32.partialorder %v215, 8.507059e+37
    %v217 = vand.u32 %v205, 2147483648
    %v218 = vor.u32 1.1754944e-38, %v217
    %v219 = vsel %vm216, %v218, %v214
    %v220 = vmul.f32 1.0, %v219
    %v221 = vtanh.pop %v201
    %v222 = vmul.f32 %v220, %v166
    %224 = vrot.lane.b32.xlu0 %v221, 64
    %v225 = vpop.permute.xlu0 %224
    %v227 = vmul.f32 %v220, %v225
    %229 = vrot.lane.b32.xlu0 %v227, 32
    %v230 = vpop.permute.xlu0 %229
    %v232 = vadd.f32 %v222, %v230
    %v233 = vtanh.pop %v232
    %235 = vrot.lane.b32.xlu0 %v233, 64
    %v236 = vpop.permute.xlu0 %235
    %v238 = vmul.f32 %v220, %v236
    %240 = vrot.lane.b32.xlu0 %v238, 32
    %v241 = vpop.permute.xlu0 %240
    %243 = vst.msk [vmem:[#allocation4 + $0x1] sm:$0x1] %vm43, %v241
    %v244 = vld [vmem:[#allocation3 + $0x2] sm:$0x1]
    %v245 = vsel %vm82, %v241, 0
    %247 = vmatpush.msra.mxu0 0.0
    %248 = vmatpush.msra.mxu0 0.0
    %249 = vmatpush.msra.mxu0 0.0
    %250 = vmatpush.msra.mxu0 0.0
    %251 = vmatpush.msra.mxu0 0.0
    %252 = vmatpush.msra.mxu0 0.0
    %253 = vmatpush.msra.mxu0 0.0
    %254 = vmatpush.msra.mxu0 0.0
    %255 = vmatpush.msra.mxu0 0.0
    %256 = vmatpush.msra.mxu0 0.0
    %257 = vmatpush.msra.mxu0 0.0
    %258 = vmatpush.msra.mxu0 0.0
    %259 = vmatpush.msra.mxu0 %v110
    %260 = vmatpush.msra.mxu0 %v109
    %261 = vmatpush.msra.mxu0 %v108
    %262 = vmatpush.msra.mxu0 %v107
    %263 = vmatmul.f32.gmra.mxu0 %v245
    %v264 = vpop.f32.mrf.mxu0
    %v265 = vadd.f32 0.0, %v264
    %266 = vdwg.mxu0
    %v267 = vadd.f32 %v244, %v265
    %v268 = vxor.u32 %v267, 2147483648
    %v269 = vmul.f32 %v268, 1.442695
    %v270 = vpow.pop %v269
    %v271 = vadd.f32 %v270, 1.0
    %v272 = vrcp.pop %v271
    %v273 = vmul.f32 %v271, %v272
    %v274 = vsub.f32 1.0, %v273
    %v275 = vmul.f32 %v272, %v274
    %v276 = vadd.f32 %v272, %v275
    %vm277 = vweird.f32 %v271
    %vm278 = vweird.f32 %v272
    %vm279 = vmor %vm277, %vm278
    %v280 = vsel %vm279, %v272, %v276
    %v281 = vand.u32 2147483647, %v271
    %vm282 = vcmp.eq.f32.partialorder %v281, 8.507059e+37
    %v283 = vand.u32 %v271, 2147483648
    %v284 = vor.u32 1.1754944e-38, %v283
    %v285 = vsel %vm282, %v284, %v280
    %v286 = vmul.f32 1.0, %v285
    %v287 = vtanh.pop %v267
    %v288 = vmul.f32 %v286, %v232
    %290 = vrot.lane.b32.xlu0 %v287, 64
    %v291 = vpop.permute.xlu0 %290
    %v293 = vmul.f32 %v286, %v291
    %295 = vrot.lane.b32.xlu0 %v293, 32
    %v296 = vpop.permute.xlu0 %295
    %v298 = vadd.f32 %v288, %v296
    %v299 = vtanh.pop %v298
    %301 = vrot.lane.b32.xlu0 %v299, 64
    %v302 = vpop.permute.xlu0 %301
    %v304 = vmul.f32 %v286, %v302
    %306 = vrot.lane.b32.xlu0 %v304, 32
    %v307 = vpop.permute.xlu0 %306
    %309 = vst.msk [vmem:[#allocation4 + $0x2] sm:$0x1] %vm43, %v307
    %v310 = vld [vmem:[#allocation3 + $0x3] sm:$0x1]
    %v311 = vsel %vm82, %v307, 0
    %313 = vmatpush.msra.mxu0 0.0
    %314 = vmatpush.msra.mxu0 0.0
    %315 = vmatpush.msra.mxu0 0.0
    %316 = vmatpush.msra.mxu0 0.0
    %317 = vmatpush.msra.mxu0 0.0
    %318 = vmatpush.msra.mxu0 0.0
    %319 = vmatpush.msra.mxu0 0.0
    %320 = vmatpush.msra.mxu0 0.0
    %321 = vmatpush.msra.mxu0 0.0
    %322 = vmatpush.msra.mxu0 0.0
    %323 = vmatpush.msra.mxu0 0.0
    %324 = vmatpush.msra.mxu0 0.0
    %325 = vmatpush.msra.mxu0 %v110
    %326 = vmatpush.msra.mxu0 %v109
    %327 = vmatpush.msra.mxu0 %v108
    %328 = vmatpush.msra.mxu0 %v107
    %329 = vmatmul.f32.gmra.mxu0 %v311
    %v330 = vpop.f32.mrf.mxu0
    %v331 = vadd.f32 0.0, %v330
    %332 = vdwg.mxu0
    %v333 = vadd.f32 %v310, %v331
    %v334 = vxor.u32 %v333, 2147483648
    %v335 = vmul.f32 %v334, 1.442695
    %v336 = vpow.pop %v335
    %v337 = vadd.f32 %v336, 1.0
    %v338 = vrcp.pop %v337
    %v339 = vmul.f32 %v337, %v338
    %v340 = vsub.f32 1.0, %v339
    %v341 = vmul.f32 %v338, %v340
    %v342 = vadd.f32 %v338, %v341
    %vm343 = vweird.f32 %v337
    %vm344 = vweird.f32 %v338
    %vm345 = vmor %vm343, %vm344
    %v346 = vsel %vm345, %v338, %v342
    %v347 = vand.u32 2147483647, %v337
    %vm348 = vcmp.eq.f32.partialorder %v347, 8.507059e+37
    %v349 = vand.u32 %v337, 2147483648
    %v350 = vor.u32 1.1754944e-38, %v349
    %v351 = vsel %vm348, %v350, %v346
    %v352 = vmul.f32 1.0, %v351
    %v353 = vtanh.pop %v333
    %v354 = vmul.f32 %v352, %v298
    %356 = vrot.lane.b32.xlu0 %v353, 64
    %v357 = vpop.permute.xlu0 %356
    %v359 = vmul.f32 %v352, %v357
    %361 = vrot.lane.b32.xlu0 %v359, 32
    %v362 = vpop.permute.xlu0 %361
    %v364 = vadd.f32 %v354, %v362
    %v365 = vtanh.pop %v364
    %367 = vrot.lane.b32.xlu0 %v365, 64
    %v368 = vpop.permute.xlu0 %367
    %v370 = vmul.f32 %v352, %v368
    %372 = vrot.lane.b32.xlu0 %v370, 32
    %v373 = vpop.permute.xlu0 %372
    %375 = vst.msk [vmem:[#allocation4 + $0x3] sm:$0x1] %vm43, %v373
    %v376 = vld [vmem:[#allocation3 + $0x4] sm:$0x1]
    %v377 = vsel %vm82, %v373, 0
    %379 = vmatpush.msra.mxu0 0.0
    %380 = vmatpush.msra.mxu0 0.0
    %381 = vmatpush.msra.mxu0 0.0
    %382 = vmatpush.msra.mxu0 0.0
    %383 = vmatpush.msra.mxu0 0.0
    %384 = vmatpush.msra.mxu0 0.0
    %385 = vmatpush.msra.mxu0 0.0
    %386 = vmatpush.msra.mxu0 0.0
    %387 = vmatpush.msra.mxu0 0.0
    %388 = vmatpush.msra.mxu0 0.0
    %389 = vmatpush.msra.mxu0 0.0
    %390 = vmatpush.msra.mxu0 0.0
    %391 = vmatpush.msra.mxu0 %v110
    %392 = vmatpush.msra.mxu0 %v109
    %393 = vmatpush.msra.mxu0 %v108
    %394 = vmatpush.msra.mxu0 %v107
    %395 = vmatmul.f32.gmra.mxu0 %v377
    %v396 = vpop.f32.mrf.mxu0
    %v397 = vadd.f32 0.0, %v396
    %398 = vdwg.mxu0
    %v399 = vadd.f32 %v376, %v397
    %v400 = vxor.u32 %v399, 2147483648
    %v401 = vmul.f32 %v400, 1.442695
    %v402 = vpow.pop %v401
    %v403 = vadd.f32 %v402, 1.0
    %v404 = vrcp.pop %v403
    %v405 = vmul.f32 %v403, %v404
    %v406 = vsub.f32 1.0, %v405
    %v407 = vmul.f32 %v404, %v406
    %v408 = vadd.f32 %v404, %v407
    %vm409 = vweird.f32 %v403
    %vm410 = vweird.f32 %v404
    %vm411 = vmor %vm409, %vm410
    %v412 = vsel %vm411, %v404, %v408
    %v413 = vand.u32 2147483647, %v403
    %vm414 = vcmp.eq.f32.partialorder %v413, 8.507059e+37
    %v415 = vand.u32 %v403, 2147483648
    %v416 = vor.u32 1.1754944e-38, %v415
    %v417 = vsel %vm414, %v416, %v412
    %v418 = vmul.f32 1.0, %v417
    %v419 = vtanh.pop %v399
    %v420 = vmul.f32 %v418, %v364
    %422 = vrot.lane.b32.xlu0 %v419, 64
    %v423 = vpop.permute.xlu0 %422
    %v425 = vmul.f32 %v418, %v423
    %427 = vrot.lane.b32.xlu0 %v425, 32
    %v428 = vpop.permute.xlu0 %427
    %v430 = vadd.f32 %v420, %v428
    %v431 = vtanh.pop %v430
    %433 = vrot.lane.b32.xlu0 %v431, 64
    %v434 = vpop.permute.xlu0 %433
    %v436 = vmul.f32 %v418, %v434
    %438 = vrot.lane.b32.xlu0 %v436, 32
    %v439 = vpop.permute.xlu0 %438
    %441 = vst.msk [vmem:[#allocation4 + $0x4] sm:$0x1] %vm43, %v439
    %v442 = vld [vmem:[#allocation3 + $0x5] sm:$0x1]
    %v443 = vsel %vm82, %v439, 0
    %445 = vmatpush.msra.mxu0 0.0
    %446 = vmatpush.msra.mxu0 0.0
    %447 = vmatpush.msra.mxu0 0.0
    %448 = vmatpush.msra.mxu0 0.0
    %449 = vmatpush.msra.mxu0 0.0
    %450 = vmatpush.msra.mxu0 0.0
    %451 = vmatpush.msra.mxu0 0.0
    %452 = vmatpush.msra.mxu0 0.0
    %453 = vmatpush.msra.mxu0 0.0
    %454 = vmatpush.msra.mxu0 0.0
    %455 = vmatpush.msra.mxu0 0.0
    %456 = vmatpush.msra.mxu0 0.0
    %457 = vmatpush.msra.mxu0 %v110
    %458 = vmatpush.msra.mxu0 %v109
    %459 = vmatpush.msra.mxu0 %v108
    %460 = vmatpush.msra.mxu0 %v107
    %461 = vmatmul.f32.gmra.mxu0 %v443
    %v462 = vpop.f32.mrf.mxu0
    %v463 = vadd.f32 0.0, %v462
    %464 = vdwg.mxu0
    %v465 = vadd.f32 %v442, %v463
    %v466 = vxor.u32 %v465, 2147483648
    %v467 = vmul.f32 %v466, 1.442695
    %v468 = vpow.pop %v467
    %v469 = vadd.f32 %v468, 1.0
    %v470 = vrcp.pop %v469
    %v471 = vmul.f32 %v469, %v470
    %v472 = vsub.f32 1.0, %v471
    %v473 = vmul.f32 %v470, %v472
    %v474 = vadd.f32 %v470, %v473
    %vm475 = vweird.f32 %v469
    %vm476 = vweird.f32 %v470
    %vm477 = vmor %vm475, %vm476
    %v478 = vsel %vm477, %v470, %v474
    %v479 = vand.u32 2147483647, %v469
    %vm480 = vcmp.eq.f32.partialorder %v479, 8.507059e+37
    %v481 = vand.u32 %v469, 2147483648
    %v482 = vor.u32 1.1754944e-38, %v481
    %v483 = vsel %vm480, %v482, %v478
    %v484 = vmul.f32 1.0, %v483
    %v485 = vtanh.pop %v465
    %v486 = vmul.f32 %v484, %v430
    %488 = vrot.lane.b32.xlu0 %v485, 64
    %v489 = vpop.permute.xlu0 %488
    %v491 = vmul.f32 %v484, %v489
    %493 = vrot.lane.b32.xlu0 %v491, 32
    %v494 = vpop.permute.xlu0 %493
    %v496 = vadd.f32 %v486, %v494
    %v497 = vtanh.pop %v496
    %499 = vrot.lane.b32.xlu0 %v497, 64
    %v500 = vpop.permute.xlu0 %499
    %v502 = vmul.f32 %v484, %v500
    %504 = vrot.lane.b32.xlu0 %v502, 32
    %v505 = vpop.permute.xlu0 %504
    %507 = vst.msk [vmem:[#allocation4 + $0x5] sm:$0x1] %vm43, %v505
    %v508 = vld [vmem:[#allocation3 + $0x6] sm:$0x1]
    %v509 = vsel %vm82, %v505, 0
    %511 = vmatpush.msra.mxu0 0.0
    %512 = vmatpush.msra.mxu0 0.0
    %513 = vmatpush.msra.mxu0 0.0
    %514 = vmatpush.msra.mxu0 0.0
    %515 = vmatpush.msra.mxu0 0.0
    %516 = vmatpush.msra.mxu0 0.0
    %517 = vmatpush.msra.mxu0 0.0
    %518 = vmatpush.msra.mxu0 0.0
    %519 = vmatpush.msra.mxu0 0.0
    %520 = vmatpush.msra.mxu0 0.0
    %521 = vmatpush.msra.mxu0 0.0
    %522 = vmatpush.msra.mxu0 0.0
    %523 = vmatpush.msra.mxu0 %v110
    %524 = vmatpush.msra.mxu0 %v109
    %525 = vmatpush.msra.mxu0 %v108
    %526 = vmatpush.msra.mxu0 %v107
    %527 = vmatmul.f32.gmra.mxu0 %v509
    %v528 = vpop.f32.mrf.mxu0
    %v529 = vadd.f32 0.0, %v528
    %530 = vdwg.mxu0
    %v531 = vadd.f32 %v508, %v529
    %v532 = vxor.u32 %v531, 2147483648
    %v533 = vmul.f32 %v532, 1.442695
    %v534 = vpow.pop %v533
    %v535 = vadd.f32 %v534, 1.0
    %v536 = vrcp.pop %v535
    %v537 = vmul.f32 %v535, %v536
    %v538 = vsub.f32 1.0, %v537
    %v539 = vmul.f32 %v536, %v538
    %v540 = vadd.f32 %v536, %v539
    %vm541 = vweird.f32 %v535
    %vm542 = vweird.f32 %v536
    %vm543 = vmor %vm541, %vm542
    %v544 = vsel %vm543, %v536, %v540
    %v545 = vand.u32 2147483647, %v535
    %vm546 = vcmp.eq.f32.partialorder %v545, 8.507059e+37
    %v547 = vand.u32 %v535, 2147483648
    %v548 = vor.u32 1.1754944e-38, %v547
    %v549 = vsel %vm546, %v548, %v544
    %v550 = vmul.f32 1.0, %v549
    %v551 = vtanh.pop %v531
    %v552 = vmul.f32 %v550, %v496
    %554 = vrot.lane.b32.xlu0 %v551, 64
    %v555 = vpop.permute.xlu0 %554
    %v557 = vmul.f32 %v550, %v555
    %559 = vrot.lane.b32.xlu0 %v557, 32
    %v560 = vpop.permute.xlu0 %559
    %v562 = vadd.f32 %v552, %v560
    %v563 = vtanh.pop %v562
    %565 = vrot.lane.b32.xlu0 %v563, 64
    %v566 = vpop.permute.xlu0 %565
    %v568 = vmul.f32 %v550, %v566
    %570 = vrot.lane.b32.xlu0 %v568, 32
    %v571 = vpop.permute.xlu0 %570
    %573 = vst.msk [vmem:[#allocation4 + $0x6] sm:$0x1] %vm43, %v571
    %v574 = vld [vmem:[#allocation3 + $0x7] sm:$0x1]
    %v575 = vsel %vm82, %v571, 0
    %577 = vmatpush.msra.mxu0 0.0
    %578 = vmatpush.msra.mxu0 0.0
    %579 = vmatpush.msra.mxu0 0.0
    %580 = vmatpush.msra.mxu0 0.0
    %581 = vmatpush.msra.mxu0 0.0
    %582 = vmatpush.msra.mxu0 0.0
    %583 = vmatpush.msra.mxu0 0.0
    %584 = vmatpush.msra.mxu0 0.0
    %585 = vmatpush.msra.mxu0 0.0
    %586 = vmatpush.msra.mxu0 0.0
    %587 = vmatpush.msra.mxu0 0.0
    %588 = vmatpush.msra.mxu0 0.0
    %589 = vmatpush.msra.mxu0 %v110
    %590 = vmatpush.msra.mxu0 %v109
    %591 = vmatpush.msra.mxu0 %v108
    %592 = vmatpush.msra.mxu0 %v107
    %593 = vmatmul.f32.gmra.mxu0 %v575
    %v594 = vpop.f32.mrf.mxu0
    %v595 = vadd.f32 0.0, %v594
    %596 = vdwg.mxu0
    %v597 = vadd.f32 %v574, %v595
    %v598 = vxor.u32 %v597, 2147483648
    %v599 = vmul.f32 %v598, 1.442695
    %v600 = vpow.pop %v599
    %v601 = vadd.f32 %v600, 1.0
    %v602 = vrcp.pop %v601
    %v603 = vmul.f32 %v601, %v602
    %v604 = vsub.f32 1.0, %v603
    %v605 = vmul.f32 %v602, %v604
    %v606 = vadd.f32 %v602, %v605
    %vm607 = vweird.f32 %v601
    %vm608 = vweird.f32 %v602
    %vm609 = vmor %vm607, %vm608
    %v610 = vsel %vm609, %v602, %v606
    %v611 = vand.u32 2147483647, %v601
    %vm612 = vcmp.eq.f32.partialorder %v611, 8.507059e+37
    %v613 = vand.u32 %v601, 2147483648
    %v614 = vor.u32 1.1754944e-38, %v613
    %v615 = vsel %vm612, %v614, %v610
    %v616 = vmul.f32 1.0, %v615
    %v617 = vtanh.pop %v597
    %v618 = vmul.f32 %v616, %v562
    %620 = vrot.lane.b32.xlu0 %v617, 64
    %v621 = vpop.permute.xlu0 %620
    %v623 = vmul.f32 %v616, %v621
    %625 = vrot.lane.b32.xlu0 %v623, 32
    %v626 = vpop.permute.xlu0 %625
    %v628 = vadd.f32 %v618, %v626
    %v629 = vtanh.pop %v628
    %631 = vrot.lane.b32.xlu0 %v629, 64
    %v632 = vpop.permute.xlu0 %631
    %v634 = vmul.f32 %v616, %v632
    %636 = vrot.lane.b32.xlu0 %v634, 32
    %v637 = vpop.permute.xlu0 %636
    %639 = vst.msk [vmem:[#allocation4 + $0x7] sm:$0x1] %vm43, %v637
    %v640 = vld [vmem:[#allocation4] sm:$0xff]
    %v641 = vld [vmem:[%s5] sm:$0xff]
    %v642 = vld [vmem:[%s5 + $0x8] sm:$0xff]
    %v643 = vld [vmem:[%s5 + $0x10] sm:$0xff]
    %v644 = vld [vmem:[%s5 + $0x18] sm:$0xff]
    %v645 = vld [vmem:[%s6] sm:$0x1]
    %v647 = vperm.slane %v645, 0
    %v650 = vsel %vm82, %v640, 0
    %652 = vmatpush.msra.mxu0 0.0
    %653 = vmatpush.msra.mxu0 0.0
    %654 = vmatpush.msra.mxu0 0.0
    %655 = vmatpush.msra.mxu0 0.0
    %656 = vmatpush.msra.mxu0 0.0
    %657 = vmatpush.msra.mxu0 0.0
    %658 = vmatpush.msra.mxu0 0.0
    %659 = vmatpush.msra.mxu0 0.0
    %660 = vmatpush.msra.mxu0 0.0
    %661 = vmatpush.msra.mxu0 0.0
    %662 = vmatpush.msra.mxu0 0.0
    %663 = vmatpush.msra.mxu0 0.0
    %664 = vmatpush.msra.mxu0 %v644
    %665 = vmatpush.msra.mxu0 %v643
    %666 = vmatpush.msra.mxu0 %v642
    %667 = vmatpush.msra.mxu0 %v641
    %668 = vmatmul.f32.gmra.mxu0 %v650
    %v669 = vpop.f32.mrf.mxu0
    %v670 = vadd.f32 %v647, %v669
    %671 = vdwg.mxu0
    %vm672 = vcmask 64512
    %v673 = vsel %vm672, %v670, -inf
    %674 = vmax.xlane.f32.xlu0 %v673
    %v675 = vpop.xlane.xlu0 %674
    %v676 = vsub.f32 %v670, %v675
    %v677 = vmul.f32 %v676, 1.442695
    %v678 = vpow.pop %v677
    %v679 = vsel %vm672, %v678, 0.0
    %680 = vadd.xlane.f32.xlu0 %v679
    %v681 = vpop.xlane.xlu0 %680
    %v682 = vlog2.pop %v681
    %v683 = vmul.f32 %v682, 0.6931472
    %v684 = vadd.f32 %v675, %v683
    %v685 = vsub.f32 %v670, %v684
    %686 = vst.msk [vmem:[#allocation8] sm:$0xff] %vm672, %v685
    // Predicated region
    $region34: #{tpu_custom_call.1} parent=1 // pred_check
      _
    $region35: #{tpu_custom_call.1} parent=1 // pred_check_branch
      %688 = sbr.rel (0) target = $region37
    $region36: #{tpu_custom_call.1} parent=1 // pred_region
      %690 = vsyncadd [#allocation6], 0
      %s692 = sshll.u32 [#allocation8], 4
      %s693 = int_to_ptr.vmem [resolvable:$true] %s692
      %s694 = sshll.u32 %s7, 4
      %s695 = int_to_ptr.hbm [resolvable:$true] %s694
      %697 = dma.vmem_to_hbm [thread:$0]  %s693, 128, %s695, [#allocation6]
    $region37: #{tpu_custom_call.1} parent=1 // pred_fallthru
      _
    // Predicated region
    $region38: #{tpu_custom_call.1} parent=1 // pred_check
      _
    $region39: #{tpu_custom_call.1} parent=1 // pred_check_branch
      %699 = sbr.rel (0) target = $region41
    $region40: #{tpu_custom_call.1} parent=1 // pred_region
      %701 = dma.done [#allocation6], 128
    $region41: #{tpu_custom_call.1} parent=1 // pred_fallthru
      _
    %702 = vsyncpa [#allocation6], 1
    %703 = vsyncpa [#allocation7], 1

</llo_original>
